<compile_context>
chip_gen: v7x
topology: tpu7x:2x2x1
jax: 0.10.0
libtpu: 0.0.40
codegen_flags: <defaults>
</compile_context>

<pallas_src>
import functools

import jax
import jax.numpy as jnp
from jax import lax
from jax.experimental import pallas as pl
from jax.experimental.pallas import tpu as pltpu

_MAX_BLOCK_BYTES = 4 * 1024 * 1024  # ~4 MiB f32 per input block (past the tile-sweep knee)


def _round_up(x, m):
    return ((x + m - 1) // m) * m


def _cdiv(a, b):
    return (a + b - 1) // b


def _tensorcores_per_chip():
    """2 only on chips with two TensorCores (v7x); 1 on v5e/v6e (and as safe default)."""
    try:
        info = pltpu.get_tpu_info()
        for attr in ("num_cores", "tensorcores_per_chip", "num_tensorcores"):
            v = getattr(info, attr, None)
            if isinstance(v, int) and v in (1, 2):
                return v
        if "7" in str(getattr(info, "chip_version", "")):
            return 2
    except Exception:
        pass
    try:
        if "v7" in jax.devices()[0].device_kind.lower():
            return 2
    except Exception:
        pass
    return 1


def _vmem_limit_bytes():
    """~3/4 of per-core VMEM capacity (~48 MiB on v7x, ~96 MiB on v5e/v6e)."""
    try:
        cap = int(pltpu.get_tpu_info().vmem_capacity_bytes)
        return max(32 * 1024 * 1024, min(cap * 3 // 4, 96 * 1024 * 1024))
    except Exception:
        return 48 * 1024 * 1024


# ----------------------------------------------------------------------------
# Streaming sum-of-squared-error kernel (HBM-bandwidth bound part of the loss).
# ----------------------------------------------------------------------------
def _sse_kernel(p_ref, t_ref, out_ref, acc_ref, *,
                block_rows, valid_rows, blocks_per_core, need_mask):
    c = pl.program_id(0)  # core-split axis ("parallel")
    i = pl.program_id(1)  # reduction sweep ("arbitrary")

    @pl.when(i == 0)
    def _init():
        acc_ref[...] = jnp.zeros_like(acc_ref)

    # Hot loop: pure elementwise VPU work + vreg-wise partial reduce (no XLU, tiny acc).
    d = p_ref[...].astype(jnp.float32) - t_ref[...].astype(jnp.float32)
    dd = d * d
    if need_mask:  # static: traced only when the last block extends past the array
        base = (c * blocks_per_core + i) * block_rows
        row = lax.broadcasted_iota(jnp.int32, dd.shape, 0) + base
        dd = jnp.where(row < valid_rows, dd, 0.0)
    lane = dd.shape[1]
    acc_ref[...] += jnp.sum(dd.reshape(block_rows // 8, 8, lane), axis=0)

    # Epilogue (once per core): cross-lane reduce of a few vregs, store partial SSE.
    @pl.when(i == pl.num_programs(1) - 1)
    def _finalize():
        out_ref[...] = jnp.full(out_ref.shape, jnp.sum(acc_ref[...]), jnp.float32)


def _sse(pred, target):
    """Sum of squared differences between two equal-shaped arrays via Pallas."""
    assert pred.shape == target.shape, (pred.shape, target.shape)
    n = int(pred.size)

    # Copy-free lane-dense 2-D view whenever possible (contiguous reshape is free).
    lane = 0
    for cand in (512, 256, 128):
        if n % cand == 0 and n // cand >= 8:
            lane = cand
            break
    if lane:
        rows = n // lane
        p2d = pred.reshape(rows, lane)
        t2d = target.reshape(rows, lane)
    else:
        # TODO(synk): sizes that are not a multiple of 128 (or tiny) still take a
        # minimal zero-padded copy; zero pads contribute 0 to the SSE so it is exact.
        lane = 128
        rows = _round_up(max(_cdiv(n, lane), 8), 8)
        pad = rows * lane - n
        p2d = jnp.pad(pred.reshape(-1), (0, pad)).reshape(rows, lane)
        t2d = jnp.pad(target.reshape(-1), (0, pad)).reshape(rows, lane)

    max_block_rows = max(8, (_MAX_BLOCK_BYTES // (4 * lane)) // 8 * 8)
    block_rows = max(8, min(max_block_rows, (rows // 8) * 8))  # never exceeds rows
    num_blocks = _cdiv(rows, block_rows)

    # Generation-aware core split + degenerate-case guard (need >=2 blocks/core).
    num_cores = _tensorcores_per_chip()
    if num_cores > 1 and (num_blocks < 2 * num_cores or num_blocks % num_cores != 0):
        num_cores = 1
    blocks_per_core = num_blocks // num_cores
    need_mask = (num_blocks * block_rows) != rows

    kernel = functools.partial(
        _sse_kernel,
        block_rows=block_rows,
        valid_rows=rows,
        blocks_per_core=blocks_per_core,
        need_mask=need_mask,
    )

    data_spec = pl.BlockSpec(
        (block_rows, lane),
        lambda c, i, _bpc=blocks_per_core: (c * _bpc + i, 0),
    )

    out = pl.pallas_call(
        kernel,
        out_shape=jax.ShapeDtypeStruct((num_cores, 1, 128), jnp.float32),
        grid_spec=pltpu.PrefetchScalarGridSpec(
            num_scalar_prefetch=0,
            grid=(num_cores, blocks_per_core),
            in_specs=[data_spec, data_spec],
            out_specs=pl.BlockSpec((1, 1, 128), lambda c, i: (c, 0, 0)),
            scratch_shapes=[pltpu.VMEM((8, lane), jnp.float32)],
        ),
        compiler_params=pltpu.CompilerParams(
            dimension_semantics=("parallel", "arbitrary"),
            vmem_limit_bytes=_vmem_limit_bytes(),
        ),
    )(p2d, t2d)

    return jnp.sum(out[:, 0, 0])


# ----------------------------------------------------------------------------
# Tiny gridless KL kernel over the (B, D) latents.
# ----------------------------------------------------------------------------
def _kl_kernel(mu_a_ref, sig_a_ref, mu_g_ref, sig_g_ref, out_ref, *, inv_b_a, inv_b_g):
    mu_a = mu_a_ref[...].astype(jnp.float32)
    sg_a = sig_a_ref[...].astype(jnp.float32)
    mu_g = mu_g_ref[...].astype(jnp.float32)
    sg_g = sig_g_ref[...].astype(jnp.float32)
    kl_a = -0.5 * jnp.sum(1.0 + sg_a - mu_a * mu_a - jnp.exp(sg_a)) * inv_b_a
    kl_g = -0.5 * jnp.sum(1.0 + sg_g - mu_g * mu_g - jnp.exp(sg_g)) * inv_b_g
    out_ref[...] = jnp.full(out_ref.shape, kl_a + kl_g, jnp.float32)


def elbo_loss(pred, target, mu_a, sigma_a, mu_g, sigma_g, alpha=1.0):
    """pred/target: tuples of two NCHW arrays; mu/sigma: (B, D); alpha: scalar.

    Inputs may be float32 or bfloat16 (cast to f32 happens inside the kernels)."""
    p0, p1 = pred
    t0, t1 = target

    sse0 = _sse(p0, t0)
    sse1 = _sse(p1, t1)

    kl_kernel = functools.partial(
        _kl_kernel,
        inv_b_a=float(1.0 / mu_a.shape[0]),
        inv_b_g=float(1.0 / mu_g.shape[0]),
    )
    kl = pl.pallas_call(
        kl_kernel,
        out_shape=jax.ShapeDtypeStruct((1, 128), jnp.float32),
    )(mu_a, sigma_a, mu_g, sigma_g)[0, 0]

    rec = sse0 * (1.0 / int(p0.size)) + sse1 * (1.0 / int(p1.size))
    return rec * alpha + kl


def elbo_loss_ref(pred, target, mu_a, sigma_a, mu_g, sigma_g, alpha=1.0):
    """Plain-JAX reference (mirrors the PyTorch module with MSE rec_loss)."""
    kl_a = jnp.mean(-0.5 * jnp.sum(1 + sigma_a - mu_a ** 2 - jnp.exp(sigma_a), axis=1))
    kl_g = jnp.mean(-0.5 * jnp.sum(1 + sigma_g - mu_g ** 2 - jnp.exp(sigma_g), axis=1))
    rec = jnp.mean((pred[0] - target[0]) ** 2) + jnp.mean((pred[1] - target[1]) ** 2)
    return rec * alpha + kl_a + kl_g


if __name__ == "__main__":
    key = jax.random.PRNGKey(0)
    kp0, kt0, kp1, kt1, kma, ksa, kmg, ksg = jax.random.split(key, 8)

    B, C, H, W = 2, 4, 16, 16   # pred/target NCHW
    D = 32                      # latent dim

    pred0 = jax.random.normal(kp0, (B, C, H, W), dtype=jnp.float32)
    tgt0 = jax.random.normal(kt0, (B, C, H, W), dtype=jnp.float32)
    pred1 = jax.random.normal(kp1, (B, C, H, W), dtype=jnp.float32)
    tgt1 = jax.random.normal(kt1, (B, C, H, W), dtype=jnp.float32)
    mu_a = jax.random.normal(kma, (B, D), dtype=jnp.float32)
    sigma_a = jax.random.normal(ksa, (B, D), dtype=jnp.float32)
    mu_g = jax.random.normal(kmg, (B, D), dtype=jnp.float32)
    sigma_g = jax.random.normal(ksg, (B, D), dtype=jnp.float32)

    alpha = 1.0

    out = elbo_loss((pred0, pred1), (tgt0, tgt1), mu_a, sigma_a, mu_g, sigma_g, alpha)
    out = jax.block_until_ready(out)

    ref = elbo_loss_ref((pred0, pred1), (tgt0, tgt1), mu_a, sigma_a, mu_g, sigma_g, alpha)
    ref = jax.block_until_ready(ref)

    assert jnp.allclose(out, ref, rtol=1e-5, atol=1e-5), (out, ref)
    print("KERNEL_OK")
</pallas_src>

<mosaic_0001>
module attributes {stable_mosaic.version = 11 : i64} {
  func.func @_sse_kernel(%arg0: i32, %arg1: i32, %arg2: memref<8x256xf32, #tpu.memory_space<vmem>>, %arg3: memref<8x256xf32, #tpu.memory_space<vmem>>, %arg4: memref<1x1x128xf32, #tpu.memory_space<vmem>>, %arg5: memref<8x256xf32, #tpu.memory_space<vmem>>) attributes {dimension_semantics = [#tpu.dimension_semantics<parallel>, #tpu.dimension_semantics<arbitrary>], iteration_bounds = array<i64: 1, 1>, scalar_prefetch = 0 : i64, scratch_operands = 1 : i64, tpu.core_type = #tpu.core_type<tc>, window_params = [{transform_indices = @transform_0, window_bounds = array<i64: 8, 256>}, {transform_indices = @transform_1, window_bounds = array<i64: 8, 256>}, {transform_indices = @transform_2, window_bounds = array<i64: 1, 1, 128>}]} {
    %c0_i32 = arith.constant 0 : i32
    %0 = arith.cmpi eq, %arg1, %c0_i32 : i32
    %1 = arith.extui %0 : i1 to i32
    %c0_i32_0 = arith.constant 0 : i32
    %2 = arith.cmpi ne, %1, %c0_i32_0 : i32
    scf.if %2 {
      %cst_10 = arith.constant 0.000000e+00 : f32
      %15 = vector.broadcast %cst_10 : f32 to vector<8x256xf32>
      %c0_11 = arith.constant 0 : index
      %c0_12 = arith.constant 0 : index
      %16 = vector.load %arg5[%c0_11, %c0_12] : memref<8x256xf32, #tpu.memory_space<vmem>>, vector<8x256xf32>
      tpu.vector_store %arg5[%c0_11, %c0_12], %15 {strides = array<i32>} : memref<8x256xf32, #tpu.memory_space<vmem>>, vector<8x256xf32>,
    } else {
    }
    %c0 = arith.constant 0 : index
    %c0_1 = arith.constant 0 : index
    %3 = vector.load %arg2[%c0, %c0_1] : memref<8x256xf32, #tpu.memory_space<vmem>>, vector<8x256xf32>
    %c0_2 = arith.constant 0 : index
    %c0_3 = arith.constant 0 : index
    %4 = vector.load %arg3[%c0_2, %c0_3] : memref<8x256xf32, #tpu.memory_space<vmem>>, vector<8x256xf32>
    %5 = arith.subf %3, %4 : vector<8x256xf32>
    %6 = arith.mulf %5, %5 : vector<8x256xf32>
    %c0_4 = arith.constant 0 : index
    %c0_5 = arith.constant 0 : index
    %7 = vector.load %arg5[%c0_4, %c0_5] : memref<8x256xf32, #tpu.memory_space<vmem>>, vector<8x256xf32>
    %8 = vector.shape_cast %6 : vector<8x256xf32> to vector<1x8x256xf32>
    %cst = arith.constant dense<0.000000e+00> : vector<8x256xf32>
    %9 = vector.multi_reduction <add>, %8, %cst [0] : vector<1x8x256xf32> to vector<8x256xf32>
    %10 = arith.addf %7, %9 : vector<8x256xf32>
    %c0_6 = arith.constant 0 : index
    %c0_7 = arith.constant 0 : index
    %11 = vector.load %arg5[%c0_6, %c0_7] : memref<8x256xf32, #tpu.memory_space<vmem>>, vector<8x256xf32>
    tpu.vector_store %arg5[%c0_6, %c0_7], %10 {strides = array<i32>} : memref<8x256xf32, #tpu.memory_space<vmem>>, vector<8x256xf32>,
    %c0_i32_8 = arith.constant 0 : i32
    %12 = arith.cmpi eq, %arg1, %c0_i32_8 : i32
    %13 = arith.extui %12 : i1 to i32
    %c0_i32_9 = arith.constant 0 : i32
    %14 = arith.cmpi ne, %13, %c0_i32_9 : i32
    scf.if %14 {
      %c0_10 = arith.constant 0 : index
      %c0_11 = arith.constant 0 : index
      %15 = vector.load %arg5[%c0_10, %c0_11] : memref<8x256xf32, #tpu.memory_space<vmem>>, vector<8x256xf32>
      %16 = vector.shape_cast %15 : vector<8x256xf32> to vector<1x8x256xf32>
      %cst_12 = arith.constant dense<0.000000e+00> : vector<1xf32>
      %17 = vector.multi_reduction <add>, %16, %cst_12 [1, 2] : vector<1x8x256xf32> to vector<1xf32>
      %18 = vector.shape_cast %17 : vector<1xf32> to vector<1x1x1xf32>
      %19 = vector.extract %18[0, 0, 0] : f32 from vector<1x1x1xf32>
      %20 = vector.broadcast %19 : f32 to vector<1x1x128xf32>
      %c0_13 = arith.constant 0 : index
      %c0_14 = arith.constant 0 : index
      %c0_15 = arith.constant 0 : index
      %21 = vector.load %arg4[%c0_13, %c0_14, %c0_15] : memref<1x1x128xf32, #tpu.memory_space<vmem>>, vector<1x1x128xf32>
      tpu.vector_store %arg4[%c0_13, %c0_14, %c0_15], %20 {strides = array<i32>} : memref<1x1x128xf32, #tpu.memory_space<vmem>>, vector<1x1x128xf32>,
    } else {
    }
    return
  }
  func.func @transform_0(%arg0: i32, %arg1: i32) -> (i32, i32) {
    %c1_i32 = arith.constant 1 : i32
    %0 = arith.muli %arg0, %c1_i32 : i32
    %1 = arith.addi %0, %arg1 : i32
    %c0_i32 = arith.constant 0 : i32
    %c0_i32_0 = arith.constant 0 : i32
    return %1, %c0_i32 : i32, i32
  }
  func.func @transform_1(%arg0: i32, %arg1: i32) -> (i32, i32) {
    %c1_i32 = arith.constant 1 : i32
    %0 = arith.muli %arg0, %c1_i32 : i32
    %1 = arith.addi %0, %arg1 : i32
    %c0_i32 = arith.constant 0 : i32
    %c0_i32_0 = arith.constant 0 : i32
    return %1, %c0_i32 : i32, i32
  }
  func.func @transform_2(%arg0: i32, %arg1: i32) -> (i32, i32, i32) {
    %c0_i32 = arith.constant 0 : i32
    %c0_i32_0 = arith.constant 0 : i32
    %c0_i32_1 = arith.constant 0 : i32
    return %arg0, %c0_i32, %c0_i32_0 : i32, i32, i32
  }
}

</mosaic_0001>

<llo_original>
// kernel: tpu_custom_call.1
$region0: #{tpu_custom_call.1}
  #allocation0 [shape = 'u32[]', space=smem, size = 0x4, offset = 0x4, fixed_abs, tag = 'smem constant byte address 0x4 - core index']
  #allocation1 [shape = 'u32[144,128]{1,0:T(1,128)}', space=vmem, size = 0x12000, scoped, tag = 'internal scratch']
  #allocation2 [shape = 'f32[8,256]{1,0:T(8,128)}', space=vmem, size = 0x2000, scoped, tag = 'scratch operand']
  %s0 = inlined_call_operand.hbm [shape: f32[8,256], index: 0, kind: input, shape index: {}]
  %s1 = inlined_call_operand.hbm [shape: f32[8,256], index: 1, kind: input, shape index: {}]
  %s2 = inlined_call_operand.hbm [shape: f32[1,1,128], index: 2, kind: output, shape index: {}]
  %s3 = sld [smem:[#allocation0]]
  $region34: #{tpu_custom_call.1} parent=0
    _
  %s5 = ssub.s32 1, %s3
  %s6 = scalar_select 0, %s5, %s3
  $region1: #{tpu_custom_call.1} parent=0
    #allocation3 [shape = 'u8[8192]{0}', space=vmem, size = 0x2000, scoped, tag = 'input window, operand 0, single buffered']
    #allocation4 [shape = 's32[1]{0}', space=sflag, size = 0x4, scoped, tag = 'scoped memory for tpu_custom_call.1']
    #allocation5 [shape = 's32[1]{0}', space=sflag, size = 0x4, scoped, tag = 'scoped memory for tpu_custom_call.1']
    #allocation6 [shape = 'u8[8192]{0}', space=vmem, size = 0x2000, scoped, tag = 'input window, operand 1, single buffered']
    #allocation7 [shape = 's32[1]{0}', space=sflag, size = 0x4, scoped, tag = 'scoped memory for tpu_custom_call.1']
    #allocation8 [shape = 'u8[512]{0}', space=vmem, size = 0x400, scoped, tag = 'output window, operand 0, single buffered']
    %7 = vsyncpa [#allocation4], 0
    %8 = vsyncpa [#allocation7], 0
    %9 = vsyncpa [#allocation5], 0
    // Predicated region
    $region2: #{tpu_custom_call.1} parent=1 // pred_check
      _
    $region3: #{tpu_custom_call.1} parent=1 // pred_check_branch
      %11 = sbr.rel (0) target = $region5
    $region4: #{tpu_custom_call.1} parent=1 // pred_region
      %s12 = sadd.s32 0, 0
      %s14 = ssub.s32 256, 256
      %15 = vsyncadd [#allocation4], %s14
      %s16 = smul.addr %s12, 2
      %s17 = smul.addr %s16, 128
      %s18 = scalar_lea.hbm %s0, %s17
      %s20 = sshll.u32 [#allocation3], 4
      %s21 = int_to_ptr.vmem [resolvable:$true] %s20
      %23 = dma.hbm_to_vmem [thread:$0]  %s18, 256, %s21, [#allocation4]
    $region5: #{tpu_custom_call.1} parent=1 // pred_fallthru
      _
    // Predicated region
    $region6: #{tpu_custom_call.1} parent=1 // pred_check
      _
    $region7: #{tpu_custom_call.1} parent=1 // pred_check_branch
      %25 = sbr.rel (0) target = $region9
    $region8: #{tpu_custom_call.1} parent=1 // pred_region
      %s26 = sadd.s32 0, 0
      %s28 = ssub.s32 256, 256
      %29 = vsyncadd [#allocation7], %s28
      %s30 = smul.addr %s26, 2
      %s31 = smul.addr %s30, 128
      %s32 = scalar_lea.hbm %s1, %s31
      %s34 = sshll.u32 [#allocation6], 4
      %s35 = int_to_ptr.vmem [resolvable:$true] %s34
      %37 = dma.hbm_to_vmem [thread:$0]  %s32, 256, %s35, [#allocation7]
    $region9: #{tpu_custom_call.1} parent=1 // pred_fallthru
      _
    // Predicated region
    $region10: #{tpu_custom_call.1} parent=1 // pred_check
      _
    $region11: #{tpu_custom_call.1} parent=1 // pred_check_branch
      %39 = sbr.rel (0) target = $region13
    $region12: #{tpu_custom_call.1} parent=1 // pred_region
      %40 = dma.done [#allocation4], 256
    $region13: #{tpu_custom_call.1} parent=1 // pred_fallthru
      _
    // Predicated region
    $region14: #{tpu_custom_call.1} parent=1 // pred_check
      _
    $region15: #{tpu_custom_call.1} parent=1 // pred_check_branch
      %42 = sbr.rel (0) target = $region17
    $region16: #{tpu_custom_call.1} parent=1 // pred_region
      %43 = dma.done [#allocation7], 256
    $region17: #{tpu_custom_call.1} parent=1 // pred_fallthru
      _
    %s44 = sadd.s32 0, 0
    %s45 = sadd.s32 0, 0
    %p46 = scmp.eq.s32.totalorder 0, 0
    // Predicated region
    $region18: #{tpu_custom_call.1} parent=1 // pred_check
      %p47 = pneg %p46
    $region19: #{tpu_custom_call.1} parent=1 // pred_check_branch
      %49 = sbr.rel (%p47) target = $region21
    $region20: #{tpu_custom_call.1} parent=1 // pred_region
      %50 = vst [vmem:[#allocation2] sm:$0xff] 0.0
      %51 = vst [vmem:[#allocation2 + $0x8] sm:$0xff] 0.0
    $region21: #{tpu_custom_call.1} parent=1 // pred_fallthru
      _
    %v52 = vld [vmem:[#allocation3] sm:$0xff]
    %v53 = vld [vmem:[#allocation3 + $0x8] sm:$0xff]
    %v54 = vld [vmem:[#allocation6] sm:$0xff]
    %v55 = vld [vmem:[#allocation6 + $0x8] sm:$0xff]
    %v56 = vsub.f32 %v52, %v54
    %v57 = vsub.f32 %v53, %v55
    %v58 = vmul.f32 %v56, %v56
    %v59 = vmul.f32 %v57, %v57
    %v60 = vld [vmem:[#allocation2] sm:$0xff]
    %v61 = vld [vmem:[#allocation2 + $0x8] sm:$0xff]
    %v62 = vadd.f32 %v58, 0.0
    %v63 = vadd.f32 %v59, 0.0
    %v64 = vadd.f32 %v60, %v62
    %v65 = vadd.f32 %v61, %v63
    %66 = vst [vmem:[#allocation2] sm:$0xff] %v64
    %67 = vst [vmem:[#allocation2 + $0x8] sm:$0xff] %v65
    // Predicated region
    $region22: #{tpu_custom_call.1} parent=1 // pred_check
      %p68 = pneg %p46
    $region23: #{tpu_custom_call.1} parent=1 // pred_check_branch
      %70 = sbr.rel (%p68) target = $region25
    $region24: #{tpu_custom_call.1} parent=1 // pred_region
      %v71 = vld [vmem:[#allocation2] sm:$0xff]
      %v72 = vld [vmem:[#allocation2 + $0x8] sm:$0xff]
      %v73 = vadd.f32 %v71, %v72
      %74 = vadd.xlane.f32.xlu0 %v73
      %v75 = vpop.xlane.xlu0 %74
      %v76 = vrot.slane %v75, 4
      %v77 = vadd.f32 %v75, %v76
      %v78 = vrot.slane %v77, 2
      %v79 = vadd.f32 %v77, %v78
      %v80 = vrot.slane %v79, 1
      %v81 = vadd.f32 %v79, %v80
      %s82 = vtos %v81
      %v83 = vstv %s82
      %84 = vst [vmem:[#allocation8] sm:$0x1] %v83
    $region25: #{tpu_custom_call.1} parent=1 // pred_fallthru
      _
    // Predicated region
    $region26: #{tpu_custom_call.1} parent=1 // pred_check
      _
    $region27: #{tpu_custom_call.1} parent=1 // pred_check_branch
      %86 = sbr.rel (0) target = $region29
    $region28: #{tpu_custom_call.1} parent=1 // pred_region
      %s88 = ssub.s32 16, 16
      %89 = vsyncadd [#allocation5], %s88
      %s91 = sshll.u32 [#allocation8], 4
      %s92 = int_to_ptr.vmem [resolvable:$true] %s91
      %94 = dma.vmem_to_hbm [thread:$0]  %s92, 16, %s2, [#allocation5]
    $region29: #{tpu_custom_call.1} parent=1 // pred_fallthru
      _
    // Predicated region
    $region30: #{tpu_custom_call.1} parent=1 // pred_check
      _
    $region31: #{tpu_custom_call.1} parent=1 // pred_check_branch
      %96 = sbr.rel (0) target = $region33
    $region32: #{tpu_custom_call.1} parent=1 // pred_region
      %97 = dma.done [#allocation5], 16
    $region33: #{tpu_custom_call.1} parent=1 // pred_fallthru
      _
    %98 = vsyncpa [#allocation4], 1
    %99 = vsyncpa [#allocation7], 1
    %100 = vsyncpa [#allocation5], 1

</llo_original>
